<compile_context>
chip_gen: v5e
topology: v5e:2x2
jax: 0.10.0
libtpu: 0.0.40
codegen_flags: <defaults>
</compile_context>

<pallas_src>
import jax
import jax.numpy as jnp
from jax import lax
from jax.experimental import pallas as pl
from jax.experimental.pallas import tpu as pltpu

EPS = 1e-5
NEG_SLOPE = 0.2


def _conv_in_lrelu_kernel(xc_ref, w_ref, o_ref):
    # xc_ref: (1, HW, K)   -- im2col'ed input for one batch element
    # w_ref : (K, Cout)    -- flattened 3x3 conv weight
    # o_ref : (1, HW, Cout)
    xc = xc_ref[0]                         # (HW, K)
    w = w_ref[...]                         # (K, Cout)

    # Conv 3x3 == one matmul on the MXU (K = 9*C_in).
    y = jnp.dot(xc, w, preferred_element_type=jnp.float32)     # (HW, Cout), f32

    hw = y.shape[0]
    inv_n = jnp.float32(1.0 / hw)

    # Single-pass InstanceNorm stats: sum and sum-of-squares in one sweep (XLU sublane reduce).
    s1 = jnp.sum(y, axis=0, keepdims=True)                      # (1, Cout)
    s2 = jnp.sum(y * y, axis=0, keepdims=True)                  # (1, Cout)
    mean = s1 * inv_n
    var = jnp.maximum(s2 * inv_n - mean * mean, 0.0)            # biased variance, clamp cancellation
    rstd = lax.rsqrt(var + EPS)                                 # EUP

    # Fused normalize + LeakyReLU(0.2):  z = a*y + b ; out = max(z, 0.2*z)
    a = rstd                                                    # (1, Cout) broadcast
    b = -mean * rstd
    z = y * a + b
    out = jnp.maximum(z, NEG_SLOPE * z)
    o_ref[0] = out.astype(o_ref.dtype)


def _conv_in_lrelu_stage(x_col: jax.Array, w_flat: jax.Array, out_dtype) -> jax.Array:
    """x_col: (N, HW, K); w_flat: (K, Cout) -> (N, HW, Cout)."""
    n, hw, k = x_col.shape
    cout = w_flat.shape[1]
    return pl.pallas_call(
        _conv_in_lrelu_kernel,
        out_shape=jax.ShapeDtypeStruct((n, hw, cout), out_dtype),
        grid_spec=pltpu.PrefetchScalarGridSpec(
            num_scalar_prefetch=0,
            grid=(n,),
            in_specs=[
                pl.BlockSpec((1, hw, k), lambda b: (b, 0, 0)),
                pl.BlockSpec((k, cout), lambda b: (0, 0)),
            ],
            out_specs=pl.BlockSpec((1, hw, cout), lambda b: (b, 0, 0)),
        ),
        compiler_params=pltpu.CompilerParams(dimension_semantics=("parallel",)),
    )(x_col, w_flat)


def _im2col_3x3(x_nhwc: jax.Array) -> jax.Array:
    """(N, H, W, C) -> (N, H*W, 9*C), tap order k = di*3 + dj, zero padding=1 (plain JAX glue)."""
    n, h, w, c = x_nhwc.shape
    xp = jnp.pad(x_nhwc, ((0, 0), (1, 1), (1, 1), (0, 0)))
    cols = [xp[:, di:di + h, dj:dj + w, :] for di in range(3) for dj in range(3)]
    xc = jnp.concatenate(cols, axis=-1)                          # (N, H, W, 9*C)
    return xc.reshape(n, h * w, 9 * c)


def _flatten_conv_weight(w_oihw: jax.Array) -> jax.Array:
    """PyTorch Conv2d weight (Cout, Cin, 3, 3) -> (9*Cin, Cout) matching im2col column order."""
    cout, cin = w_oihw.shape[0], w_oihw.shape[1]
    return jnp.transpose(w_oihw, (2, 3, 1, 0)).reshape(9 * cin, cout)


def conv_block(x_nchw: jax.Array, w1: jax.Array, w2: jax.Array, drop_prob: float = 0.0) -> jax.Array:
    """Forward of ConvBlock.

    x_nchw: (N, Cin, H, W)
    w1: (Cout, Cin, 3, 3)   -- first Conv2d weight (PyTorch layout, bias=False)
    w2: (Cout, Cout, 3, 3)  -- second Conv2d weight
    Returns (N, Cout, H, W).
    """
    n, cin, h, w = x_nchw.shape
    cout = w1.shape[0]

    # --- stage 1: Conv3x3 -> InstanceNorm -> LeakyReLU ---
    x_nhwc = jnp.transpose(x_nchw, (0, 2, 3, 1))                 # (N, H, W, Cin)
    xc1 = _im2col_3x3(x_nhwc)                                    # (N, HW, 9*Cin)
    w1f = _flatten_conv_weight(w1)                               # (9*Cin, Cout)
    h1 = _conv_in_lrelu_stage(xc1, w1f, x_nchw.dtype)            # (N, HW, Cout)

    # Dropout2d: identity at inference.
    # TODO(synk): training-mode Dropout2d (per-channel Bernoulli mask + 1/(1-p) scale) not implemented.

    # --- stage 2: Conv3x3 -> InstanceNorm -> LeakyReLU ---
    h1_nhwc = h1.reshape(n, h, w, cout)
    xc2 = _im2col_3x3(h1_nhwc)                                   # (N, HW, 9*Cout)
    w2f = _flatten_conv_weight(w2)                               # (9*Cout, Cout)
    out = _conv_in_lrelu_stage(xc2, w2f, x_nchw.dtype)           # (N, HW, Cout)

    # --- glue: rebuild NCHW ---
    out = jnp.transpose(out.reshape(n, h, w, cout), (0, 3, 1, 2))
    return out


def _reference(x_nchw, w1, w2):
    """Pure-JAX reference of the PyTorch forward (eval mode), for correctness checking."""
    def conv(x, wgt):
        return lax.conv_general_dilated(
            x, wgt, window_strides=(1, 1), padding=((1, 1), (1, 1)),
            dimension_numbers=("NCHW", "OIHW", "NCHW"))

    def inorm_lrelu(y):
        mean = jnp.mean(y, axis=(2, 3), keepdims=True)
        var = jnp.mean((y - mean) ** 2, axis=(2, 3), keepdims=True)
        z = (y - mean) * lax.rsqrt(var + EPS)
        return jnp.where(z >= 0, z, NEG_SLOPE * z)

    h1 = inorm_lrelu(conv(x_nchw, w1))
    return inorm_lrelu(conv(h1, w2))


if __name__ == "__main__":
    key = jax.random.PRNGKey(0)
    k_x, k_w1, k_w2 = jax.random.split(key, 3)

    N, Cin, Cout, H, W = 2, 4, 8, 16, 16

    x = jax.random.normal(k_x, (N, Cin, H, W), dtype=jnp.float32)

    bound1 = 1.0 / ((Cin * 9) ** 0.5)
    bound2 = 1.0 / ((Cout * 9) ** 0.5)
    w1 = jax.random.uniform(k_w1, (Cout, Cin, 3, 3), dtype=jnp.float32,
                            minval=-bound1, maxval=bound1)
    w2 = jax.random.uniform(k_w2, (Cout, Cout, 3, 3), dtype=jnp.float32,
                            minval=-bound2, maxval=bound2)

    out = conv_block(x, w1, w2, drop_prob=0.0)
    out = jax.block_until_ready(out)

    ref = _reference(x, w1, w2)
    assert out.shape == (N, Cout, H, W), out.shape
    err = float(jnp.max(jnp.abs(out - ref)))
    assert jnp.allclose(out, ref, atol=1e-3, rtol=1e-3), err

    print("KERNEL_OK")
</pallas_src>

<mosaic_0001>
module attributes {stable_mosaic.version = 11 : i64} {
  func.func @_conv_in_lrelu_kernel(%arg0: i32, %arg1: memref<1x256x36xf32, #tpu.memory_space<vmem>>, %arg2: memref<36x8xf32, #tpu.memory_space<vmem>>, %arg3: memref<1x256x8xf32, #tpu.memory_space<vmem>>) attributes {dimension_semantics = [#tpu.dimension_semantics<parallel>], iteration_bounds = array<i64: 2>, scalar_prefetch = 0 : i64, scratch_operands = 0 : i64, tpu.core_type = #tpu.core_type<tc>, window_params = [{transform_indices = @transform_0, window_bounds = array<i64: 1, 256, 36>}, {pipeline_mode = #tpu.pipeline_mode<synchronous>, transform_indices = @transform_1, window_bounds = array<i64: 36, 8>}, {transform_indices = @transform_2, window_bounds = array<i64: 1, 256, 8>}]} {
    %c0 = arith.constant 0 : index
    %c0_0 = arith.constant 0 : index
    %c0_1 = arith.constant 0 : index
    %0 = vector.load %arg1[%c0, %c0_0, %c0_1] : memref<1x256x36xf32, #tpu.memory_space<vmem>>, vector<1x256x36xf32>
    %1 = vector.shape_cast %0 : vector<1x256x36xf32> to vector<256x36xf32>
    %c0_2 = arith.constant 0 : index
    %c0_3 = arith.constant 0 : index
    %2 = vector.load %arg2[%c0_2, %c0_3] : memref<36x8xf32, #tpu.memory_space<vmem>>, vector<36x8xf32>
    %cst = arith.constant dense<0.000000e+00> : vector<256x8xf32>
    %3 = tpu.matmul %1, %2, %cst {dimension_numbers = #tpu.dot_dimension_numbers<[1], [0], [0], [1], [0, 0, 1, 1], [], []>} : vector<256x36xf32>, vector<36x8xf32>, vector<256x8xf32> -> vector<256x8xf32>
    %cst_4 = arith.constant dense<0.000000e+00> : vector<8xf32>
    %4 = vector.multi_reduction <add>, %3, %cst_4 [0] : vector<256x8xf32> to vector<8xf32>
    %5 = vector.shape_cast %4 : vector<8xf32> to vector<1x8xf32>
    %6 = arith.mulf %3, %3 : vector<256x8xf32>
    %cst_5 = arith.constant dense<0.000000e+00> : vector<8xf32>
    %7 = vector.multi_reduction <add>, %6, %cst_5 [0] : vector<256x8xf32> to vector<8xf32>
    %8 = vector.shape_cast %7 : vector<8xf32> to vector<1x8xf32>
    %cst_6 = arith.constant 3.906250e-03 : f32
    %9 = vector.broadcast %cst_6 : f32 to vector<1x8xf32>
    %10 = arith.mulf %5, %9 : vector<1x8xf32>
    %cst_7 = arith.constant 3.906250e-03 : f32
    %11 = vector.broadcast %cst_7 : f32 to vector<1x8xf32>
    %12 = arith.mulf %8, %11 : vector<1x8xf32>
    %13 = arith.mulf %10, %10 : vector<1x8xf32>
    %14 = arith.subf %12, %13 : vector<1x8xf32>
    %cst_8 = arith.constant 0.000000e+00 : f32
    %15 = vector.broadcast %cst_8 : f32 to vector<1x8xf32>
    %16 = arith.maximumf %14, %15 : vector<1x8xf32>
    %cst_9 = arith.constant 9.99999974E-6 : f32
    %17 = vector.broadcast %cst_9 : f32 to vector<1x8xf32>
    %18 = arith.addf %16, %17 : vector<1x8xf32>
    %19 = math.rsqrt %18 : vector<1x8xf32>
    %cst_10 = arith.constant 0.000000e+00 : f32
    %20 = vector.broadcast %cst_10 : f32 to vector<1x8xf32>
    %21 = arith.subf %20, %10 : vector<1x8xf32>
    %22 = arith.mulf %21, %19 : vector<1x8xf32>
    %23 = vector.broadcast %19 : vector<1x8xf32> to vector<256x8xf32>
    %24 = arith.mulf %3, %23 : vector<256x8xf32>
    %25 = vector.broadcast %22 : vector<1x8xf32> to vector<256x8xf32>
    %26 = arith.addf %24, %25 : vector<256x8xf32>
    %cst_11 = arith.constant 2.000000e-01 : f32
    %27 = vector.broadcast %cst_11 : f32 to vector<256x8xf32>
    %28 = arith.mulf %27, %26 : vector<256x8xf32>
    %29 = arith.maximumf %26, %28 : vector<256x8xf32>
    %c0_12 = arith.constant 0 : index
    %c0_13 = arith.constant 0 : index
    %c0_14 = arith.constant 0 : index
    %30 = vector.load %arg3[%c0_12, %c0_13, %c0_14] : memref<1x256x8xf32, #tpu.memory_space<vmem>>, vector<1x256x8xf32>
    %31 = vector.shape_cast %30 : vector<1x256x8xf32> to vector<256x8xf32>
    %32 = vector.shape_cast %29 : vector<256x8xf32> to vector<1x256x8xf32>
    tpu.vector_store %arg3[%c0_12, %c0_13, %c0_14], %32 {strides = array<i32>} : memref<1x256x8xf32, #tpu.memory_space<vmem>>, vector<1x256x8xf32>,
    return
  }
  func.func @transform_0(%arg0: i32) -> (i32, i32, i32) {
    %c0_i32 = arith.constant 0 : i32
    %c0_i32_0 = arith.constant 0 : i32
    %c0_i32_1 = arith.constant 0 : i32
    return %arg0, %c0_i32, %c0_i32_0 : i32, i32, i32
  }
  func.func @transform_1(%arg0: i32) -> (i32, i32) {
    %c0_i32 = arith.constant 0 : i32
    %c0_i32_0 = arith.constant 0 : i32
    %c0_i32_1 = arith.constant 0 : i32
    return %c0_i32, %c0_i32_0 : i32, i32
  }
  func.func @transform_2(%arg0: i32) -> (i32, i32, i32) {
    %c0_i32 = arith.constant 0 : i32
    %c0_i32_0 = arith.constant 0 : i32
    %c0_i32_1 = arith.constant 0 : i32
    return %arg0, %c0_i32, %c0_i32_0 : i32, i32, i32
  }
}

</mosaic_0001>

<llo_original>
// kernel: tpu_custom_call.1
$region0: #{tpu_custom_call.1}
  #allocation0 [shape = 'u32[]', space=smem, size = 0x4, offset = 0x4, fixed_abs, tag = 'smem constant byte address 0x4 - core index']
  #allocation1 [shape = 'u32[72,128]{1,0:T(1,128)}', space=vmem, size = 0x9000, scoped, tag = 'internal scratch']
  %s0 = inlined_call_operand.vmem [shape: f32[2,256,36], index: 0, kind: input, shape index: {}]
  %s1 = inlined_call_operand.vmem [shape: f32[36,8], index: 1, kind: input, shape index: {}]
  %s2 = inlined_call_operand.vmem [shape: f32[2,256,8], index: 2, kind: output, shape index: {}]
  %s3 = sld [smem:[#allocation0]]
  $region41: #{tpu_custom_call.1} parent=0
    _
  %s5 = ssub.s32 1, %s3
  %s6 = scalar_select 0, %s5, %s3
  loop: start=0, step=1, limit=4
  $region2: #{tpu_custom_call.1} parent=0 // loop_pre_header
    _
  $region3: #{tpu_custom_call.1} parent=0 // loop_header
    %s8 = sphi 0, %s12
    %p9 = scmp.ge.s32.totalorder %s8, 4
    %s18 = sphi 0, %s20
    %s21 = sphi 0, %s18
    %s22 = sphi 0, %s21
    %s38 = sphi 0, %s22
    %s42 = sphi 0, %s42
    %s44 = sphi 0, %s42
    %s45 = sphi 0, %s44
    %s59 = sphi 0, %s45
    %s65 = sphi 0, %s67
    %s68 = sphi 0, %s65
    %s69 = sphi 0, %s68
    %s85 = sphi 0, %s69
  $region4: #{tpu_custom_call.1} parent=0 // loop_header_branch
    %11 = sbr.rel (%p9) target = $region8
  $region5: #{tpu_custom_call.1} parent=0 // loop_body
    %s13 = ssub.s32 %s8, 1
    %s14 = ssub.s32 %s8, 2
    %s15 = sadd.s32 %s8, 1
    %s16 = ssub.s32 %s8, %s15
    %p17 = scmp.eq.s32.totalorder %s16, 0
    %s19 = sadd.s32 %s18, 1
    %s20 = scalar_select %p17, %s18, %s19
    %p23 = pneg %p17
    %p24 = scmp.eq.s32.totalorder %s8, 1
    %p25 = por %p23, %p24
    %p26 = scmp.ne.s32.totalorder %s18, %s21
    %p27 = scmp.eq.s32.totalorder %s8, 0
    %p28 = por %p26, %p27
    %p29 = scmp.ne.s32.totalorder %s18, %s21
    %p30 = scmp.eq.s32.totalorder %s13, 1
    %p31 = por %p29, %p30
    %p32 = scmp.ne.s32.totalorder %s21, %s22
    %p33 = scmp.eq.s32.totalorder %s13, 0
    %p34 = por %p32, %p33
    %p35 = scmp.ne.s32.totalorder %s21, %s22
    %p36 = scmp.eq.s32.totalorder %s14, 1
    %p37 = por %p35, %p36
    %p39 = scmp.ne.s32.totalorder %s22, %s38
    %p40 = scmp.eq.s32.totalorder %s14, 0
    %p41 = por %p39, %p40
    %s43 = sadd.s32 %s42, 1
    %p46 = scmp.eq.s32.totalorder %s8, 1
    %p47 = scmp.ne.s32.totalorder %s42, %s44
    %p48 = scmp.eq.s32.totalorder %s8, 0
    %p49 = por %p47, %p48
    %p50 = scmp.ne.s32.totalorder %s42, %s44
    %p51 = scmp.eq.s32.totalorder %s13, 1
    %p52 = por %p50, %p51
    %p53 = scmp.ne.s32.totalorder %s44, %s45
    %p54 = scmp.eq.s32.totalorder %s13, 0
    %p55 = por %p53, %p54
    %p56 = scmp.ne.s32.totalorder %s44, %s45
    %p57 = scmp.eq.s32.totalorder %s14, 1
    %p58 = por %p56, %p57
    %p60 = scmp.ne.s32.totalorder %s45, %s59
    %p61 = scmp.eq.s32.totalorder %s14, 0
    %p62 = por %p60, %p61
    %s63 = ssub.s32 %s8, %s15
    %p64 = scmp.eq.s32.totalorder %s63, 0
    %s66 = sadd.s32 %s65, 1
    %s67 = scalar_select %p64, %s65, %s66
    %p70 = pneg %p64
    %p71 = scmp.eq.s32.totalorder %s8, 1
    %p72 = por %p70, %p71
    %p73 = scmp.ne.s32.totalorder %s65, %s68
    %p74 = scmp.eq.s32.totalorder %s8, 0
    %p75 = por %p73, %p74
    %p76 = scmp.ne.s32.totalorder %s65, %s68
    %p77 = scmp.eq.s32.totalorder %s13, 1
    %p78 = por %p76, %p77
    %p79 = scmp.ne.s32.totalorder %s68, %s69
    %p80 = scmp.eq.s32.totalorder %s13, 0
    %p81 = por %p79, %p80
    %p82 = scmp.ne.s32.totalorder %s68, %s69
    %p83 = scmp.eq.s32.totalorder %s14, 1
    %p84 = por %p82, %p83
    %p86 = scmp.ne.s32.totalorder %s69, %s85
    %p87 = scmp.eq.s32.totalorder %s14, 0
    %p88 = por %p86, %p87
    %p89 = scmp.le.s32.totalorder 1, %s8
    %p90 = scmp.lt.s32.totalorder %s8, 3
    %p91 = pnand %p89, %p90
    %p92 = pneg %p91
    // Predicated region
    $region9: #{tpu_custom_call.1} parent=5 // pred_check
      _
    $region10: #{tpu_custom_call.1} parent=5 // pred_check_branch
      %94 = sbr.rel (%p91) target = $region12
    $region11: #{tpu_custom_call.1} parent=5 // pred_region
      %s95 = ssub.s32 %s8, 1
      // Predicated region
      $region13: #{tpu_custom_call.1} parent=11 // pred_check
        %p96 = pneg %p55
      $region14: #{tpu_custom_call.1} parent=11 // pred_check_branch
        %98 = sbr.rel (%p96) target = $region16
      $region15: #{tpu_custom_call.1} parent=11 // pred_region
        _
      $region16: #{tpu_custom_call.1} parent=11 // pred_fallthru
        _
    $region12: #{tpu_custom_call.1} parent=5 // pred_fallthru
      _
    %p99 = scmp.lt.s32.totalorder %s8, 2
    // Predicated region
    $region17: #{tpu_custom_call.1} parent=5 // pred_check
      %p100 = pneg %p99
    $region18: #{tpu_custom_call.1} parent=5 // pred_check_branch
      %102 = sbr.rel (%p100) target = $region20
    $region19: #{tpu_custom_call.1} parent=5 // pred_region
      // Predicated region
      $region21: #{tpu_custom_call.1} parent=19 // pred_check
        %p103 = pneg %p28
      $region22: #{tpu_custom_call.1} parent=19 // pred_check_branch
        %105 = sbr.rel (%p103) target = $region24
      $region23: #{tpu_custom_call.1} parent=19 // pred_region
        %p106 = scmp.lt.s32.totalorder %s8, 1
        %s107 = scalar_select %p106, %s8, 1
        %s108 = smul.addr %s107, 32
        %s109 = smul.addr %s108, 8
        %s110 = scalar_lea.vmem %s0, %s109
      $region24: #{tpu_custom_call.1} parent=19 // pred_fallthru
        _
    $region20: #{tpu_custom_call.1} parent=5 // pred_fallthru
      _
    %p111 = scmp.le.s32.totalorder 1, %s8
    %p112 = scmp.lt.s32.totalorder %s8, 3
    %p113 = pnand %p111, %p112
    %p114 = pneg %p113
    // Predicated region
    $region25: #{tpu_custom_call.1} parent=5 // pred_check
      _
    $region26: #{tpu_custom_call.1} parent=5 // pred_check_branch
      %116 = sbr.rel (%p113) target = $region28
    $region27: #{tpu_custom_call.1} parent=5 // pred_region
      %s117 = ssub.s32 %s8, 1
      %p118 = scmp.lt.s32.totalorder %s13, 1
      %s119 = scalar_select %p118, %s13, 1
      %s120 = smul.addr %s119, 32
      %s121 = smul.addr %s120, 8
      %s122 = scalar_lea.vmem %s0, %s121
      %p123 = pneg %p34
      %p124 = pneg %p31
      %p125 = pneg %p55
      %p126 = pneg %p52
      %p127 = pneg %p81
      %p128 = pneg %p78
      %p129 = scmp.lt.s32.totalorder %s13, 1
      %s130 = scalar_select %p129, %s13, 1
      %s131 = smul.addr %s130, 32
      %s132 = smul.addr %s131, 8
      %s133 = scalar_lea.vmem %s2, %s132
      %p134 = scmp.lt.s32.totalorder %s13, 1
      %s135 = scalar_select %p134, %s13, 1
      %s136 = smul.addr %s135, 32
      %s137 = smul.addr %s136, 8
      %s138 = scalar_lea.vmem %s0, %s137
      %p139 = scmp.lt.s32.totalorder %s13, 1
      %s140 = scalar_select %p139, %s13, 1
      %s141 = smul.addr %s140, 32
      %s142 = smul.addr %s141, 8
      %s143 = scalar_lea.vmem %s2, %s142
      %v144 = vld [vmem:[%s138] sm:$0xff]
      %v145 = vld [vmem:[%s138 + $0x8] sm:$0xff]
      %v146 = vld [vmem:[%s138 + $0x10] sm:$0xff]
      %v147 = vld [vmem:[%s138 + $0x18] sm:$0xff]
      %v148 = vld [vmem:[%s138 + $0x20] sm:$0xff]
      %v149 = vld [vmem:[%s138 + $0x28] sm:$0xff]
      %v150 = vld [vmem:[%s138 + $0x30] sm:$0xff]
      %v151 = vld [vmem:[%s138 + $0x38] sm:$0xff]
      %v152 = vld [vmem:[%s138 + $0x40] sm:$0xff]
      %v153 = vld [vmem:[%s138 + $0x48] sm:$0xff]
      %v154 = vld [vmem:[%s138 + $0x50] sm:$0xff]
      %v155 = vld [vmem:[%s138 + $0x58] sm:$0xff]
      %v156 = vld [vmem:[%s138 + $0x60] sm:$0xff]
      %v157 = vld [vmem:[%s138 + $0x68] sm:$0xff]
      %v158 = vld [vmem:[%s138 + $0x70] sm:$0xff]
      %v159 = vld [vmem:[%s138 + $0x78] sm:$0xff]
      %v160 = vld [vmem:[%s138 + $0x80] sm:$0xff]
      %v161 = vld [vmem:[%s138 + $0x88] sm:$0xff]
      %v162 = vld [vmem:[%s138 + $0x90] sm:$0xff]
      %v163 = vld [vmem:[%s138 + $0x98] sm:$0xff]
      %v164 = vld [vmem:[%s138 + $0xa0] sm:$0xff]
      %v165 = vld [vmem:[%s138 + $0xa8] sm:$0xff]
      %v166 = vld [vmem:[%s138 + $0xb0] sm:$0xff]
      %v167 = vld [vmem:[%s138 + $0xb8] sm:$0xff]
      %v168 = vld [vmem:[%s138 + $0xc0] sm:$0xff]
      %v169 = vld [vmem:[%s138 + $0xc8] sm:$0xff]
      %v170 = vld [vmem:[%s138 + $0xd0] sm:$0xff]
      %v171 = vld [vmem:[%s138 + $0xd8] sm:$0xff]
      %v172 = vld [vmem:[%s138 + $0xe0] sm:$0xff]
      %v173 = vld [vmem:[%s138 + $0xe8] sm:$0xff]
      %v174 = vld [vmem:[%s138 + $0xf0] sm:$0xff]
      %v175 = vld [vmem:[%s138 + $0xf8] sm:$0xff]
      %v176 = vld [vmem:[%s1] sm:$0xff]
      %v177 = vld [vmem:[%s1 + $0x8] sm:$0xff]
      %v178 = vld [vmem:[%s1 + $0x10] sm:$0xff]
      %v179 = vld [vmem:[%s1 + $0x18] sm:$0xff]
      %v180 = vld [vmem:[%s1 + $0x20] sm:$0xf]
      %vm181 = vcmask 293888
      %v183 = vsel %vm181, %v144, 0
      %v186 = vsel %vm181, %v145, 0
      %v189 = vsel %vm181, %v146, 0
      %v192 = vsel %vm181, %v147, 0
      %v195 = vsel %vm181, %v148, 0
      %v198 = vsel %vm181, %v149, 0
      %v201 = vsel %vm181, %v150, 0
      %v204 = vsel %vm181, %v151, 0
      %v207 = vsel %vm181, %v152, 0
      %v210 = vsel %vm181, %v153, 0
      %v213 = vsel %vm181, %v154, 0
      %v216 = vsel %vm181, %v155, 0
      %v219 = vsel %vm181, %v156, 0
      %v222 = vsel %vm181, %v157, 0
      %v225 = vsel %vm181, %v158, 0
      %v228 = vsel %vm181, %v159, 0
      %v231 = vsel %vm181, %v160, 0
      %v234 = vsel %vm181, %v161, 0
      %v237 = vsel %vm181, %v162, 0
      %v240 = vsel %vm181, %v163, 0
      %v243 = vsel %vm181, %v164, 0
      %v246 = vsel %vm181, %v165, 0
      %v249 = vsel %vm181, %v166, 0
      %v252 = vsel %vm181, %v167, 0
      %v255 = vsel %vm181, %v168, 0
      %v258 = vsel %vm181, %v169, 0
      %v261 = vsel %vm181, %v170, 0
      %v264 = vsel %vm181, %v171, 0
      %v267 = vsel %vm181, %v172, 0
      %v270 = vsel %vm181, %v173, 0
      %v273 = vsel %vm181, %v174, 0
      %v276 = vsel %vm181, %v175, 0
      %vm278 = vcmask 1043456
      %v280 = vsel %vm278, %v180, 0
      %282 = vmatpush.msra.mxu0 0.0
      %283 = vmatpush.msra.mxu0 0.0
      %284 = vmatpush.msra.mxu0 0.0
      %285 = vmatpush.msra.mxu0 0.0
      %286 = vmatpush.msra.mxu0 0.0
      %287 = vmatpush.msra.mxu0 0.0
      %288 = vmatpush.msra.mxu0 0.0
      %289 = vmatpush.msra.mxu0 0.0
      %290 = vmatpush.msra.mxu0 0.0
      %291 = vmatpush.msra.mxu0 0.0
      %292 = vmatpush.msra.mxu0 0.0
      %293 = vmatpush.msra.mxu0 %v280
      %294 = vmatpush.msra.mxu0 %v179
      %295 = vmatpush.msra.mxu0 %v178
      %296 = vmatpush.msra.mxu0 %v177
      %297 = vmatpush.msra.mxu0 %v176
      %298 = vmatmul.f32.gmra.mxu0 %v183
      %v299 = vpop.f32.mrf.mxu0
      %v300 = vadd.f32 0.0, %v299
      %301 = vmatmul.f32.gmra.mxu0 %v186
      %v302 = vpop.f32.mrf.mxu0
      %v303 = vadd.f32 0.0, %v302
      %304 = vmatmul.f32.gmra.mxu0 %v189
      %v305 = vpop.f32.mrf.mxu0
      %v306 = vadd.f32 0.0, %v305
      %307 = vmatmul.f32.gmra.mxu0 %v192
      %v308 = vpop.f32.mrf.mxu0
      %v309 = vadd.f32 0.0, %v308
      %310 = vmatmul.f32.gmra.mxu0 %v195
      %v311 = vpop.f32.mrf.mxu0
      %v312 = vadd.f32 0.0, %v311
      %313 = vmatmul.f32.gmra.mxu0 %v198
      %v314 = vpop.f32.mrf.mxu0
      %v315 = vadd.f32 0.0, %v314
      %316 = vmatmul.f32.gmra.mxu0 %v201
      %v317 = vpop.f32.mrf.mxu0
      %v318 = vadd.f32 0.0, %v317
      %319 = vmatmul.f32.gmra.mxu0 %v204
      %v320 = vpop.f32.mrf.mxu0
      %v321 = vadd.f32 0.0, %v320
      %322 = vmatmul.f32.gmra.mxu0 %v207
      %v323 = vpop.f32.mrf.mxu0
      %v324 = vadd.f32 0.0, %v323
      %325 = vmatmul.f32.gmra.mxu0 %v210
      %v326 = vpop.f32.mrf.mxu0
      %v327 = vadd.f32 0.0, %v326
      %328 = vmatmul.f32.gmra.mxu0 %v213
      %v329 = vpop.f32.mrf.mxu0
      %v330 = vadd.f32 0.0, %v329
      %331 = vmatmul.f32.gmra.mxu0 %v216
      %v332 = vpop.f32.mrf.mxu0
      %v333 = vadd.f32 0.0, %v332
      %334 = vmatmul.f32.gmra.mxu0 %v219
      %v335 = vpop.f32.mrf.mxu0
      %v336 = vadd.f32 0.0, %v335
      %337 = vmatmul.f32.gmra.mxu0 %v222
      %v338 = vpop.f32.mrf.mxu0
      %v339 = vadd.f32 0.0, %v338
      %340 = vmatmul.f32.gmra.mxu0 %v225
      %v341 = vpop.f32.mrf.mxu0
      %v342 = vadd.f32 0.0, %v341
      %343 = vmatmul.f32.gmra.mxu0 %v228
      %v344 = vpop.f32.mrf.mxu0
      %v345 = vadd.f32 0.0, %v344
      %346 = vmatmul.f32.gmra.mxu0 %v231
      %v347 = vpop.f32.mrf.mxu0
      %v348 = vadd.f32 0.0, %v347
      %349 = vmatmul.f32.gmra.mxu0 %v234
      %v350 = vpop.f32.mrf.mxu0
      %v351 = vadd.f32 0.0, %v350
      %352 = vmatmul.f32.gmra.mxu0 %v237
      %v353 = vpop.f32.mrf.mxu0
      %v354 = vadd.f32 0.0, %v353
      %355 = vmatmul.f32.gmra.mxu0 %v240
      %v356 = vpop.f32.mrf.mxu0
      %v357 = vadd.f32 0.0, %v356
      %358 = vmatmul.f32.gmra.mxu0 %v243
      %v359 = vpop.f32.mrf.mxu0
      %v360 = vadd.f32 0.0, %v359
      %361 = vmatmul.f32.gmra.mxu0 %v246
      %v362 = vpop.f32.mrf.mxu0
      %v363 = vadd.f32 0.0, %v362
      %364 = vmatmul.f32.gmra.mxu0 %v249
      %v365 = vpop.f32.mrf.mxu0
      %v366 = vadd.f32 0.0, %v365
      %367 = vmatmul.f32.gmra.mxu0 %v252
      %v368 = vpop.f32.mrf.mxu0
      %v369 = vadd.f32 0.0, %v368
      %370 = vmatmul.f32.gmra.mxu0 %v255
      %v371 = vpop.f32.mrf.mxu0
      %v372 = vadd.f32 0.0, %v371
      %373 = vmatmul.f32.gmra.mxu0 %v258
      %v374 = vpop.f32.mrf.mxu0
      %v375 = vadd.f32 0.0, %v374
      %376 = vmatmul.f32.gmra.mxu0 %v261
      %v377 = vpop.f32.mrf.mxu0
      %v378 = vadd.f32 0.0, %v377
      %379 = vmatmul.f32.gmra.mxu0 %v264
      %v380 = vpop.f32.mrf.mxu0
      %v381 = vadd.f32 0.0, %v380
      %382 = vmatmul.f32.gmra.mxu0 %v267
      %v383 = vpop.f32.mrf.mxu0
      %v384 = vadd.f32 0.0, %v383
      %385 = vmatmul.f32.gmra.mxu0 %v270
      %v386 = vpop.f32.mrf.mxu0
      %v387 = vadd.f32 0.0, %v386
      %388 = vmatmul.f32.gmra.mxu0 %v273
      %v389 = vpop.f32.mrf.mxu0
      %v390 = vadd.f32 0.0, %v389
      %391 = vmatmul.f32.gmra.mxu0 %v276
      %v392 = vpop.f32.mrf.mxu0
      %v393 = vadd.f32 0.0, %v392
      %394 = vdwg.mxu0
      %vm395 = vcmask 64512
      %v396 = vsel %vm395, %v300, 0.0
      %v397 = vsel %vm395, %v303, 0.0
      %v398 = vadd.f32 %v396, %v397
      %v399 = vsel %vm395, %v306, 0.0
      %v400 = vadd.f32 %v398, %v399
      %v401 = vsel %vm395, %v309, 0.0
      %v402 = vadd.f32 %v400, %v401
      %v403 = vsel %vm395, %v312, 0.0
      %v404 = vadd.f32 %v402, %v403
      %v405 = vsel %vm395, %v315, 0.0
      %v406 = vadd.f32 %v404, %v405
      %v407 = vsel %vm395, %v318, 0.0
      %v408 = vadd.f32 %v406, %v407
      %v409 = vsel %vm395, %v321, 0.0
      %v410 = vadd.f32 %v408, %v409
      %v411 = vsel %vm395, %v324, 0.0
      %v412 = vadd.f32 %v410, %v411
      %v413 = vsel %vm395, %v327, 0.0
      %v414 = vadd.f32 %v412, %v413
      %v415 = vsel %vm395, %v330, 0.0
      %v416 = vadd.f32 %v414, %v415
      %v417 = vsel %vm395, %v333, 0.0
      %v418 = vadd.f32 %v416, %v417
      %v419 = vsel %vm395, %v336, 0.0
      %v420 = vadd.f32 %v418, %v419
      %v421 = vsel %vm395, %v339, 0.0
      %v422 = vadd.f32 %v420, %v421
      %v423 = vsel %vm395, %v342, 0.0
      %v424 = vadd.f32 %v422, %v423
      %v425 = vsel %vm395, %v345, 0.0
      %v426 = vadd.f32 %v424, %v425
      %v427 = vsel %vm395, %v348, 0.0
      %v428 = vadd.f32 %v426, %v427
      %v429 = vsel %vm395, %v351, 0.0
      %v430 = vadd.f32 %v428, %v429
      %v431 = vsel %vm395, %v354, 0.0
      %v432 = vadd.f32 %v430, %v431
      %v433 = vsel %vm395, %v357, 0.0
      %v434 = vadd.f32 %v432, %v433
      %v435 = vsel %vm395, %v360, 0.0
      %v436 = vadd.f32 %v434, %v435
      %v437 = vsel %vm395, %v363, 0.0
      %v438 = vadd.f32 %v436, %v437
      %v439 = vsel %vm395, %v366, 0.0
      %v440 = vadd.f32 %v438, %v439
      %v441 = vsel %vm395, %v369, 0.0
      %v442 = vadd.f32 %v440, %v441
      %v443 = vsel %vm395, %v372, 0.0
      %v444 = vadd.f32 %v442, %v443
      %v445 = vsel %vm395, %v375, 0.0
      %v446 = vadd.f32 %v444, %v445
      %v447 = vsel %vm395, %v378, 0.0
      %v448 = vadd.f32 %v446, %v447
      %v449 = vsel %vm395, %v381, 0.0
      %v450 = vadd.f32 %v448, %v449
      %v451 = vsel %vm395, %v384, 0.0
      %v452 = vadd.f32 %v450, %v451
      %v453 = vsel %vm395, %v387, 0.0
      %v454 = vadd.f32 %v452, %v453
      %v455 = vsel %vm395, %v390, 0.0
      %v456 = vadd.f32 %v454, %v455
      %v457 = vsel %vm395, %v393, 0.0
      %v458 = vadd.f32 %v456, %v457
      %v459 = vrot.slane %v458, 4
      %v460 = vadd.f32 %v458, %v459
      %v461 = vrot.slane %v460, 2
      %v462 = vadd.f32 %v460, %v461
      %v463 = vrot.slane %v462, 1
      %v464 = vadd.f32 %v462, %v463
      %v465 = vmul.f32 %v300, %v300
      %v466 = vmul.f32 %v303, %v303
      %v467 = vmul.f32 %v306, %v306
      %v468 = vmul.f32 %v309, %v309
      %v469 = vmul.f32 %v312, %v312
      %v470 = vmul.f32 %v315, %v315
      %v471 = vmul.f32 %v318, %v318
      %v472 = vmul.f32 %v321, %v321
      %v473 = vmul.f32 %v324, %v324
      %v474 = vmul.f32 %v327, %v327
      %v475 = vmul.f32 %v330, %v330
      %v476 = vmul.f32 %v333, %v333
      %v477 = vmul.f32 %v336, %v336
      %v478 = vmul.f32 %v339, %v339
      %v479 = vmul.f32 %v342, %v342
      %v480 = vmul.f32 %v345, %v345
      %v481 = vmul.f32 %v348, %v348
      %v482 = vmul.f32 %v351, %v351
      %v483 = vmul.f32 %v354, %v354
      %v484 = vmul.f32 %v357, %v357
      %v485 = vmul.f32 %v360, %v360
      %v486 = vmul.f32 %v363, %v363
      %v487 = vmul.f32 %v366, %v366
      %v488 = vmul.f32 %v369, %v369
      %v489 = vmul.f32 %v372, %v372
      %v490 = vmul.f32 %v375, %v375
      %v491 = vmul.f32 %v378, %v378
      %v492 = vmul.f32 %v381, %v381
      %v493 = vmul.f32 %v384, %v384
      %v494 = vmul.f32 %v387, %v387
      %v495 = vmul.f32 %v390, %v390
      %v496 = vmul.f32 %v393, %v393
      %v497 = vsel %vm395, %v465, 0.0
      %v498 = vsel %vm395, %v466, 0.0
      %v499 = vadd.f32 %v497, %v498
      %v500 = vsel %vm395, %v467, 0.0
      %v501 = vadd.f32 %v499, %v500
      %v502 = vsel %vm395, %v468, 0.0
      %v503 = vadd.f32 %v501, %v502
      %v504 = vsel %vm395, %v469, 0.0
      %v505 = vadd.f32 %v503, %v504
      %v506 = vsel %vm395, %v470, 0.0
      %v507 = vadd.f32 %v505, %v506
      %v508 = vsel %vm395, %v471, 0.0
      %v509 = vadd.f32 %v507, %v508
      %v510 = vsel %vm395, %v472, 0.0
      %v511 = vadd.f32 %v509, %v510
      %v512 = vsel %vm395, %v473, 0.0
      %v513 = vadd.f32 %v511, %v512
      %v514 = vsel %vm395, %v474, 0.0
      %v515 = vadd.f32 %v513, %v514
      %v516 = vsel %vm395, %v475, 0.0
      %v517 = vadd.f32 %v515, %v516
      %v518 = vsel %vm395, %v476, 0.0
      %v519 = vadd.f32 %v517, %v518
      %v520 = vsel %vm395, %v477, 0.0
      %v521 = vadd.f32 %v519, %v520
      %v522 = vsel %vm395, %v478, 0.0
      %v523 = vadd.f32 %v521, %v522
      %v524 = vsel %vm395, %v479, 0.0
      %v525 = vadd.f32 %v523, %v524
      %v526 = vsel %vm395, %v480, 0.0
      %v527 = vadd.f32 %v525, %v526
      %v528 = vsel %vm395, %v481, 0.0
      %v529 = vadd.f32 %v527, %v528
      %v530 = vsel %vm395, %v482, 0.0
      %v531 = vadd.f32 %v529, %v530
      %v532 = vsel %vm395, %v483, 0.0
      %v533 = vadd.f32 %v531, %v532
      %v534 = vsel %vm395, %v484, 0.0
      %v535 = vadd.f32 %v533, %v534
      %v536 = vsel %vm395, %v485, 0.0
      %v537 = vadd.f32 %v535, %v536
      %v538 = vsel %vm395, %v486, 0.0
      %v539 = vadd.f32 %v537, %v538
      %v540 = vsel %vm395, %v487, 0.0
      %v541 = vadd.f32 %v539, %v540
      %v542 = vsel %vm395, %v488, 0.0
      %v543 = vadd.f32 %v541, %v542
      %v544 = vsel %vm395, %v489, 0.0
      %v545 = vadd.f32 %v543, %v544
      %v546 = vsel %vm395, %v490, 0.0
      %v547 = vadd.f32 %v545, %v546
      %v548 = vsel %vm395, %v491, 0.0
      %v549 = vadd.f32 %v547, %v548
      %v550 = vsel %vm395, %v492, 0.0
      %v551 = vadd.f32 %v549, %v550
      %v552 = vsel %vm395, %v493, 0.0
      %v553 = vadd.f32 %v551, %v552
      %v554 = vsel %vm395, %v494, 0.0
      %v555 = vadd.f32 %v553, %v554
      %v556 = vsel %vm395, %v495, 0.0
      %v557 = vadd.f32 %v555, %v556
      %v558 = vsel %vm395, %v496, 0.0
      %v559 = vadd.f32 %v557, %v558
      %v560 = vrot.slane %v559, 4
      %v561 = vadd.f32 %v559, %v560
      %v562 = vrot.slane %v561, 2
      %v563 = vadd.f32 %v561, %v562
      %v564 = vrot.slane %v563, 1
      %v565 = vadd.f32 %v563, %v564
      %v566 = vmul.f32 %v464, 0.00390625
      %v567 = vmul.f32 %v565, 0.00390625
      %v568 = vmul.f32 %v566, %v566
      %v569 = vsub.f32 %v567, %v568
      %v570 = vmax.f32 %v569, 0.0
      %v571 = vadd.f32 %v570, 1e-05
      %v572 = vrsqrt.pop %v571
      %v573 = vmul.f32 %v572, %v571
      %v574 = vmul.f32 %v573, %v572
      %v575 = vmul.f32 0.5, %v574
      %v576 = vsub.f32 1.5, %v575
      %v577 = vmul.f32 %v572, %v576
      %vm578 = vweird.f32 %v571
      %vm579 = vweird.f32 %v572
      %vm580 = vmor %vm578, %vm579
      %v581 = vsel %vm580, %v572, %v577
      %v582 = vsub.f32 0.0, %v566
      %v583 = vmul.f32 %v582, %v581
      %v584 = vmul.f32 %v300, %v581
      %v585 = vmul.f32 %v303, %v581
      %v586 = vmul.f32 %v306, %v581
      %v587 = vmul.f32 %v309, %v581
      %v588 = vmul.f32 %v312, %v581
      %v589 = vmul.f32 %v315, %v581
      %v590 = vmul.f32 %v318, %v581
      %v591 = vmul.f32 %v321, %v581
      %v592 = vmul.f32 %v324, %v581
      %v593 = vmul.f32 %v327, %v581
      %v594 = vmul.f32 %v330, %v581
      %v595 = vmul.f32 %v333, %v581
      %v596 = vmul.f32 %v336, %v581
      %v597 = vmul.f32 %v339, %v581
      %v598 = vmul.f32 %v342, %v581
      %v599 = vmul.f32 %v345, %v581
      %v600 = vmul.f32 %v348, %v581
      %v601 = vmul.f32 %v351, %v581
      %v602 = vmul.f32 %v354, %v581
      %v603 = vmul.f32 %v357, %v581
      %v604 = vmul.f32 %v360, %v581
      %v605 = vmul.f32 %v363, %v581
      %v606 = vmul.f32 %v366, %v581
      %v607 = vmul.f32 %v369, %v581
      %v608 = vmul.f32 %v372, %v581
      %v609 = vmul.f32 %v375, %v581
      %v610 = vmul.f32 %v378, %v581
      %v611 = vmul.f32 %v381, %v581
      %v612 = vmul.f32 %v384, %v581
      %v613 = vmul.f32 %v387, %v581
      %v614 = vmul.f32 %v390, %v581
      %v615 = vmul.f32 %v393, %v581
      %v616 = vadd.f32 %v584, %v583
      %v617 = vadd.f32 %v585, %v583
      %v618 = vadd.f32 %v586, %v583
      %v619 = vadd.f32 %v587, %v583
      %v620 = vadd.f32 %v588, %v583
      %v621 = vadd.f32 %v589, %v583
      %v622 = vadd.f32 %v590, %v583
      %v623 = vadd.f32 %v591, %v583
      %v624 = vadd.f32 %v592, %v583
      %v625 = vadd.f32 %v593, %v583
      %v626 = vadd.f32 %v594, %v583
      %v627 = vadd.f32 %v595, %v583
      %v628 = vadd.f32 %v596, %v583
      %v629 = vadd.f32 %v597, %v583
      %v630 = vadd.f32 %v598, %v583
      %v631 = vadd.f32 %v599, %v583
      %v632 = vadd.f32 %v600, %v583
      %v633 = vadd.f32 %v601, %v583
      %v634 = vadd.f32 %v602, %v583
      %v635 = vadd.f32 %v603, %v583
      %v636 = vadd.f32 %v604, %v583
      %v637 = vadd.f32 %v605, %v583
      %v638 = vadd.f32 %v606, %v583
      %v639 = vadd.f32 %v607, %v583
      %v640 = vadd.f32 %v608, %v583
      %v641 = vadd.f32 %v609, %v583
      %v642 = vadd.f32 %v610, %v583
      %v643 = vadd.f32 %v611, %v583
      %v644 = vadd.f32 %v612, %v583
      %v645 = vadd.f32 %v613, %v583
      %v646 = vadd.f32 %v614, %v583
      %v647 = vadd.f32 %v615, %v583
      %v648 = vmul.f32 %v616, 0.2
      %v649 = vmul.f32 %v617, 0.2
      %v650 = vmul.f32 %v618, 0.2
      %v651 = vmul.f32 %v619, 0.2
      %v652 = vmul.f32 %v620, 0.2
      %v653 = vmul.f32 %v621, 0.2
      %v654 = vmul.f32 %v622, 0.2
      %v655 = vmul.f32 %v623, 0.2
      %v656 = vmul.f32 %v624, 0.2
      %v657 = vmul.f32 %v625, 0.2
      %v658 = vmul.f32 %v626, 0.2
      %v659 = vmul.f32 %v627, 0.2
      %v660 = vmul.f32 %v628, 0.2
      %v661 = vmul.f32 %v629, 0.2
      %v662 = vmul.f32 %v630, 0.2
      %v663 = vmul.f32 %v631, 0.2
      %v664 = vmul.f32 %v632, 0.2
      %v665 = vmul.f32 %v633, 0.2
      %v666 = vmul.f32 %v634, 0.2
      %v667 = vmul.f32 %v635, 0.2
      %v668 = vmul.f32 %v636, 0.2
      %v669 = vmul.f32 %v637, 0.2
      %v670 = vmul.f32 %v638, 0.2
      %v671 = vmul.f32 %v639, 0.2
      %v672 = vmul.f32 %v640, 0.2
      %v673 = vmul.f32 %v641, 0.2
      %v674 = vmul.f32 %v642, 0.2
      %v675 = vmul.f32 %v643, 0.2
      %v676 = vmul.f32 %v644, 0.2
      %v677 = vmul.f32 %v645, 0.2
      %v678 = vmul.f32 %v646, 0.2
      %v679 = vmul.f32 %v647, 0.2
      %v680 = vmax.f32 %v616, %v648
      %v681 = vmax.f32 %v617, %v649
      %v682 = vmax.f32 %v618, %v650
      %v683 = vmax.f32 %v619, %v651
      %v684 = vmax.f32 %v620, %v652
      %v685 = vmax.f32 %v621, %v653
      %v686 = vmax.f32 %v622, %v654
      %v687 = vmax.f32 %v623, %v655
      %v688 = vmax.f32 %v624, %v656
      %v689 = vmax.f32 %v625, %v657
      %v690 = vmax.f32 %v626, %v658
      %v691 = vmax.f32 %v627, %v659
      %v692 = vmax.f32 %v628, %v660
      %v693 = vmax.f32 %v629, %v661
      %v694 = vmax.f32 %v630, %v662
      %v695 = vmax.f32 %v631, %v663
      %v696 = vmax.f32 %v632, %v664
      %v697 = vmax.f32 %v633, %v665
      %v698 = vmax.f32 %v634, %v666
      %v699 = vmax.f32 %v635, %v667
      %v700 = vmax.f32 %v636, %v668
      %v701 = vmax.f32 %v637, %v669
      %v702 = vmax.f32 %v638, %v670
      %v703 = vmax.f32 %v639, %v671
      %v704 = vmax.f32 %v640, %v672
      %v705 = vmax.f32 %v641, %v673
      %v706 = vmax.f32 %v642, %v674
      %v707 = vmax.f32 %v643, %v675
      %v708 = vmax.f32 %v644, %v676
      %v709 = vmax.f32 %v645, %v677
      %v710 = vmax.f32 %v646, %v678
      %v711 = vmax.f32 %v647, %v679
      %712 = vst.msk [vmem:[%s143] sm:$0xff] %vm395, %v680
      %713 = vst.msk [vmem:[%s143 + $0x8] sm:$0xff] %vm395, %v681
      %714 = vst.msk [vmem:[%s143 + $0x10] sm:$0xff] %vm395, %v682
      %715 = vst.msk [vmem:[%s143 + $0x18] sm:$0xff] %vm395, %v683
      %716 = vst.msk [vmem:[%s143 + $0x20] sm:$0xff] %vm395, %v684
      %717 = vst.msk [vmem:[%s143 + $0x28] sm:$0xff] %vm395, %v685
      %718 = vst.msk [vmem:[%s143 + $0x30] sm:$0xff] %vm395, %v686
      %719 = vst.msk [vmem:[%s143 + $0x38] sm:$0xff] %vm395, %v687
      %720 = vst.msk [vmem:[%s143 + $0x40] sm:$0xff] %vm395, %v688
      %721 = vst.msk [vmem:[%s143 + $0x48] sm:$0xff] %vm395, %v689
      %722 = vst.msk [vmem:[%s143 + $0x50] sm:$0xff] %vm395, %v690
      %723 = vst.msk [vmem:[%s143 + $0x58] sm:$0xff] %vm395, %v691
      %724 = vst.msk [vmem:[%s143 + $0x60] sm:$0xff] %vm395, %v692
      %725 = vst.msk [vmem:[%s143 + $0x68] sm:$0xff] %vm395, %v693
      %726 = vst.msk [vmem:[%s143 + $0x70] sm:$0xff] %vm395, %v694
      %727 = vst.msk [vmem:[%s143 + $0x78] sm:$0xff] %vm395, %v695
      %728 = vst.msk [vmem:[%s143 + $0x80] sm:$0xff] %vm395, %v696
      %729 = vst.msk [vmem:[%s143 + $0x88] sm:$0xff] %vm395, %v697
      %730 = vst.msk [vmem:[%s143 + $0x90] sm:$0xff] %vm395, %v698
      %731 = vst.msk [vmem:[%s143 + $0x98] sm:$0xff] %vm395, %v699
      %732 = vst.msk [vmem:[%s143 + $0xa0] sm:$0xff] %vm395, %v700
      %733 = vst.msk [vmem:[%s143 + $0xa8] sm:$0xff] %vm395, %v701
      %734 = vst.msk [vmem:[%s143 + $0xb0] sm:$0xff] %vm395, %v702
      %735 = vst.msk [vmem:[%s143 + $0xb8] sm:$0xff] %vm395, %v703
      %736 = vst.msk [vmem:[%s143 + $0xc0] sm:$0xff] %vm395, %v704
      %737 = vst.msk [vmem:[%s143 + $0xc8] sm:$0xff] %vm395, %v705
      %738 = vst.msk [vmem:[%s143 + $0xd0] sm:$0xff] %vm395, %v706
      %739 = vst.msk [vmem:[%s143 + $0xd8] sm:$0xff] %vm395, %v707
      %740 = vst.msk [vmem:[%s143 + $0xe0] sm:$0xff] %vm395, %v708
      %741 = vst.msk [vmem:[%s143 + $0xe8] sm:$0xff] %vm395, %v709
      %742 = vst.msk [vmem:[%s143 + $0xf0] sm:$0xff] %vm395, %v710
      %743 = vst.msk [vmem:[%s143 + $0xf8] sm:$0xff] %vm395, %v711
      %p744 = scmp.lt.s32.totalorder %s13, 1
      %s745 = scalar_select %p744, %s13, 1
      %s746 = smul.addr %s745, 32
      %s747 = smul.addr %s746, 8
      %s748 = scalar_lea.vmem %s2, %s747
      // Predicated region
      $region29: #{tpu_custom_call.1} parent=27 // pred_check
        %p749 = pneg %p78
      $region30: #{tpu_custom_call.1} parent=27 // pred_check_branch
        %751 = sbr.rel (%p749) target = $region32
      $region31: #{tpu_custom_call.1} parent=27 // pred_region
        _
      $region32: #{tpu_custom_call.1} parent=27 // pred_fallthru
        _
    $region28: #{tpu_custom_call.1} parent=5 // pred_fallthru
      _
    %p752 = scmp.le.s32.totalorder 2, %s8
    // Predicated region
    $region33: #{tpu_custom_call.1} parent=5 // pred_check
      %p753 = pneg %p752
    $region34: #{tpu_custom_call.1} parent=5 // pred_check_branch
      %755 = sbr.rel (%p753) target = $region36
    $region35: #{tpu_custom_call.1} parent=5 // pred_region
      %s756 = ssub.s32 %s8, 2
      // Predicated region
      $region37: #{tpu_custom_call.1} parent=35 // pred_check
        %p757 = pneg %p84
      $region38: #{tpu_custom_call.1} parent=35 // pred_check_branch
        %759 = sbr.rel (%p757) target = $region40
      $region39: #{tpu_custom_call.1} parent=35 // pred_region
        %p760 = scmp.lt.s32.totalorder %s14, 1
        %s761 = scalar_select %p760, %s14, 1
        %s762 = smul.addr %s761, 32
        %s763 = smul.addr %s762, 8
        %s764 = scalar_lea.vmem %s2, %s763
      $region40: #{tpu_custom_call.1} parent=35 // pred_fallthru
        _
    $region36: #{tpu_custom_call.1} parent=5 // pred_fallthru
      _
  $region6: #{tpu_custom_call.1} parent=0 // loop_footer
    %s12 = sadd.s32 1, %s8
  $region7: #{tpu_custom_call.1} parent=0 // loop_footer_branch
    %7 = sbr.rel target = $region3
  $region8: #{tpu_custom_call.1} parent=0 // loop_exit
    _

</llo_original>
